<compile_context>
chip_gen: v7x
topology: tpu7x:2x2x1
jax: 0.10.0
libtpu: 0.0.40
codegen_flags: <defaults>
</compile_context>

<pallas_src>
import math

import jax
import jax.numpy as jnp
from jax.experimental import pallas as pl
from jax.experimental.pallas import tpu as pltpu


def _round_up(a, b):
    return ((a + b - 1) // b) * b


def _pick_tile(total, max_tile, align):
    """Largest multiple of `align` that divides `total` and is <= max_tile."""
    t = min(total, max(align, (max_tile // align) * align))
    t = max(align, (t // align) * align)
    while total % t:
        t -= align
    return t


def _query_vmem_capacity_bytes():
    """Physical per-core VMEM in bytes; conservative 64 MiB (v7x) fallback."""
    try:
        info = pltpu.get_tpu_info()
        for name in ("vmem_capacity_bytes", "vmem_size_bytes", "vmem_bytes"):
            v = getattr(info, name, None)
            if v:
                return int(v)
    except Exception:
        pass
    return 64 * 2**20


def _fused_irfft2_kernel(xr_ref, xi_ref, wre_ref, wim_ref, o_ref):
    """Fused 2-D inverse transform, one (batch-tile, lon-tile) MXU step.

    xr/xi   : (TB, L*M)   bf16  real / imag spectrum rows for TB (b,c) slices
    wre/wim : (L*M, NP)   bf16  fused inverse-DFT halves, VMEM-resident
                                (constant index_map -> fetched from HBM once)
    o       : (TB, TN)    f32
    """
    tn = o_ref.shape[-1]
    col = pl.multiple_of(pl.program_id(1) * tn, 128)
    o_ref[...] = (
        jnp.dot(xr_ref[...], wre_ref[:, pl.ds(col, tn)],
                preferred_element_type=jnp.float32)
        + jnp.dot(xi_ref[...], wim_ref[:, pl.ds(col, tn)],
                  preferred_element_type=jnp.float32))


def _two_stage_irfft2_kernel(xr_ref, xi_ref, wr_ref, wi_ref, wc_ref,
                             o_ref, f_scr):
    """Lat-axis complex ifft cached in scratch + one lon-axis irfft matmul/tile.

    xr/xi : (Lp, Mp)      bf16  zero-padded spectrum of one (b, c) slice
    wr/wi : (nlat, Lp)    bf16  ortho inverse-DFT (lat axis), VMEM-resident
    wc    : (2*Mp, NP)    bf16  stacked [cos ; -sin] one-sided irfft matrix,
                                VMEM-resident, sliced per lon tile with pl.ds
    o     : (nlat, TN)    f32
    f_scr : (nlat, 2*Mp)  bf16  [Re(f) | Im(f)], reused across the lon tiles
    """
    j = pl.program_id(1)
    mp = xr_ref.shape[-1]

    @pl.when(j == 0)
    def _():
        xr = xr_ref[...]
        xi = xi_ref[...]
        wr = wr_ref[...]
        wi = wi_ref[...]
        # 4-multiply complex matmul (avoids the Karatsuba bf16 cancellation).
        fr = (jnp.dot(wr, xr, preferred_element_type=jnp.float32)
              - jnp.dot(wi, xi, preferred_element_type=jnp.float32))
        fi = (jnp.dot(wr, xi, preferred_element_type=jnp.float32)
              + jnp.dot(wi, xr, preferred_element_type=jnp.float32))
        # Mp is a multiple of 128 -> both half-stores are lane-dense.
        f_scr[:, :mp] = fr.astype(f_scr.dtype)
        f_scr[:, mp:] = fi.astype(f_scr.dtype)

    tn = o_ref.shape[-1]
    col = pl.multiple_of(j * tn, 128)
    # single fused lon matmul: [Re(f) | Im(f)] @ [ca ; cb]
    o_ref[...] = jnp.dot(f_scr[...], wc_ref[:, pl.ds(col, tn)],
                         preferred_element_type=jnp.float32)


class DistributedInverseRealFFT2:
    """JAX/Pallas port of modulus DistributedInverseRealFFT2 (single device)."""

    def __init__(self, nlat, nlon, lmax=None, mmax=None,
                 compute_dtype=jnp.bfloat16, fused_limit_bytes=None,
                 force_two_stage=False):
        # TODO(synk): multi-rank distributed_transpose_h/_w (all-to-all) would
        # need pltpu.make_async_remote_copy; identity for comm sizes of 1.
        self.comm_size_h = 1
        self.comm_size_w = 1
        self.comm_rank_w = 0
        self.nlat = nlat
        self.nlon = nlon
        self.lmax = lmax or self.nlat
        self.mmax = mmax or self.nlon // 2 + 1
        self.compute_dtype = compute_dtype
        self._ds = jnp.dtype(compute_dtype).itemsize

        # pads (all zero for comm sizes of 1; kept for parity with the module)
        latdist = (self.nlat + self.comm_size_h - 1) // self.comm_size_h
        self.latpad = latdist * self.comm_size_h - self.nlat
        londist = (self.nlon + self.comm_size_w - 1) // self.comm_size_w
        self.lonpad = londist * self.comm_size_w - self.nlon

        # effective truncation lengths (ifft/irfft "n=" trimming)
        self.L = L = min(self.lmax, self.nlat)
        self.M = M = min(self.mmax, self.nlon // 2 + 1)
        self.LM = L * M

        # --- per-generation VMEM policy -------------------------------------
        vmem_cap = _query_vmem_capacity_bytes()
        # Keep headroom for compiler-internal scratch / semaphores: ~52 MiB on
        # v7x (64 MiB physical), ~100 MiB on v5e/v6e (128 MiB physical).
        self._vmem_budget = min(int(vmem_cap * 0.8), vmem_cap - 12 * 2**20)
        # Scoped-VMEM default is 16 MiB on v5e (32 MiB on v6e/v7x); raise the
        # explicit limit whenever the kernel gets near the smallest default.
        self._vmem_raise_threshold = 12 * 2**20
        if fused_limit_bytes is None:
            # W halves are double-buffered even though they are constant, so
            # keep 2x the fused matrix comfortably under the budget.
            fused_limit_bytes = (24 * 2**20 if vmem_cap >= 96 * 2**20
                                 else 10 * 2**20)

        # --- ortho complex inverse-DFT matrix along lat: (nlat, L) ----------
        k = jnp.arange(self.nlat, dtype=jnp.float32)[:, None]
        l = jnp.arange(L, dtype=jnp.float32)[None, :]
        ang_h = 2.0 * math.pi * k * l / float(self.nlat)
        sh = 1.0 / math.sqrt(float(self.nlat))
        wr = jnp.cos(ang_h) * sh
        wi = jnp.sin(ang_h) * sh

        # --- ortho one-sided irfft matrices along lon: (M, nlon) ------------
        m_idx = jnp.arange(M)
        m = m_idx.astype(jnp.float32)[:, None]
        n = jnp.arange(self.nlon, dtype=jnp.float32)[None, :]
        ang_w = 2.0 * math.pi * m * n / float(self.nlon)
        sw = 1.0 / math.sqrt(float(self.nlon))
        # Hermitian weighting: DC (and Nyquist if present) counted once, rest
        # twice; imag of DC/Nyquist dropped (sin == 0 there), matching irfft.
        is_dc = m_idx == 0
        is_nyq = (self.nlon % 2 == 0) & (m_idx == self.nlon // 2)
        cm = jnp.where(is_dc | is_nyq, 1.0, 2.0).astype(jnp.float32)[:, None]
        ca = cm * jnp.cos(ang_w) * sw        # multiplies Re(f)
        cb = -cm * jnp.sin(ang_w) * sw       # multiplies Im(f)

        self.N = N = self.nlat * self.nlon
        self.NP_fused = _round_up(N, 128)
        fused_bytes = 2 * self.LM * self.NP_fused * self._ds
        self.use_fused = (not force_two_stage) and fused_bytes <= fused_limit_bytes

        if self.use_fused:
            # Fused 2-D inverse-transform matrices (lane-dense output width):
            #   W_re[(l,m),(y,x)] =  wr[y,l]*ca[m,x] + wi[y,l]*cb[m,x]
            #   W_im[(l,m),(y,x)] =  wr[y,l]*cb[m,x] - wi[y,l]*ca[m,x]
            w_re = (jnp.einsum("yl,mx->lmyx", wr, ca)
                    + jnp.einsum("yl,mx->lmyx", wi, cb)).reshape(self.LM, N)
            w_im = (jnp.einsum("yl,mx->lmyx", wr, cb)
                    - jnp.einsum("yl,mx->lmyx", wi, ca)).reshape(self.LM, N)
            pad = self.NP_fused - N
            if pad:
                w_re = jnp.pad(w_re, ((0, 0), (0, pad)))
                w_im = jnp.pad(w_im, ((0, 0), (0, pad)))
            self.w_re = w_re.astype(compute_dtype)
            self.w_im = w_im.astype(compute_dtype)
        else:
            # Two-stage weights.  L and M are zero-padded to multiples of 128
            # so every matmul contraction dim / scratch store is 128-aligned
            # (unmasked vst; biggest single layout lever, esp. on v5e).
            self.Lp = Lp = _round_up(L, 128)
            self.Mp = Mp = _round_up(M, 128)
            self.NP_lon = NP = _round_up(self.nlon, 128)
            self.wr_lat = jnp.pad(wr, ((0, 0), (0, Lp - L))).astype(compute_dtype)
            self.wi_lat = jnp.pad(wi, ((0, 0), (0, Lp - L))).astype(compute_dtype)
            wc2 = jnp.concatenate(
                [jnp.pad(ca, ((0, Mp - M), (0, NP - self.nlon))),
                 jnp.pad(cb, ((0, Mp - M), (0, NP - self.nlon)))], axis=0)
            self.wc2 = wc2.astype(compute_dtype)            # (2*Mp, NP)
            self.tn_lon = self._pick_tn_two_stage()

    # ------------------------------------------------------------------ utils
    def _two_stage_vmem_need(self, tn):
        ds = self._ds
        return (2 * 2 * self.Lp * self.Mp * ds        # xr, xi blocks (x2 buf)
                + 2 * 2 * self.nlat * self.Lp * ds    # wr, wi resident (x2 buf)
                + 2 * 2 * self.Mp * self.NP_lon * ds  # wc2 resident (x2 buf)
                + 2 * self.nlat * tn * 4              # f32 output blocks
                + self.nlat * 2 * self.Mp * ds)       # [Re|Im] scratch

    def _pick_tn_two_stage(self):
        tn = _pick_tile(self.NP_lon, 1024, 128)
        while tn > 128 and self._two_stage_vmem_need(tn) > self._vmem_budget:
            tn = _pick_tile(self.NP_lon, tn - 128, 128)
        return tn

    def _compiler_params(self, semantics, vmem_need_bytes):
        kwargs = dict(dimension_semantics=semantics)
        # Raise the scoped VMEM limit whenever we approach the smallest
        # per-generation default (16 MiB on v5e); cap below physical VMEM so
        # the compiler keeps headroom (esp. on v7x's 64 MiB).
        if vmem_need_bytes > self._vmem_raise_threshold:
            kwargs["vmem_limit_bytes"] = int(
                min(vmem_need_bytes * 5 // 4 + (2 << 20), self._vmem_budget))
        return pltpu.CompilerParams(**kwargs)

    # ------------------------------------------------------------- fused path
    def _forward_fused(self, xr, xi):
        BC = xr.shape[0]
        LM, NP, N = self.LM, self.NP_fused, self.N
        ds = self._ds

        # No concatenate: re / im planes go to the kernel as two inputs.
        xr = xr.reshape(BC, LM).astype(self.compute_dtype)
        xi = xi.reshape(BC, LM).astype(self.compute_dtype)

        # Batch tile: multiple of 16 (bf16 sublane pack), grown up to 512 to
        # amortize the ~0.35us per-grid-step overhead and fill the 256-wide MXU.
        TB = min(512, _round_up(BC, 16))
        while TB > 16 and 4 * TB * LM * ds > 8 * 2**20:   # cap input buffers
            TB -= 16
        BCp = _round_up(BC, TB)
        if BCp > BC:
            xr = jnp.pad(xr, ((0, BCp - BC), (0, 0)))
            xi = jnp.pad(xi, ((0, BCp - BC), (0, 0)))

        def need(tn):
            return (2 * 2 * TB * LM * ds          # xr, xi blocks
                    + 2 * 2 * LM * NP * ds        # W halves (resident, x2 buf)
                    + 2 * TB * tn * 4)            # f32 output blocks
        TN = _pick_tile(NP, NP, 128)              # one big matmul if it fits
        while TN > 128 and need(TN) > self._vmem_budget:
            TN = _pick_tile(NP, TN - 128, 128)

        out = pl.pallas_call(
            _fused_irfft2_kernel,
            out_shape=jax.ShapeDtypeStruct((BCp, NP), jnp.float32),
            grid=(BCp // TB, NP // TN),
            in_specs=[
                pl.BlockSpec((TB, LM), lambda i, j: (i, 0)),
                pl.BlockSpec((TB, LM), lambda i, j: (i, 0)),
                # Full-width blocks with constant index_map: W halves are
                # DMA'd from HBM exactly once and stay VMEM-resident; the lon
                # window is sliced inside the kernel with pl.ds.
                pl.BlockSpec((LM, NP), lambda i, j: (0, 0)),
                pl.BlockSpec((LM, NP), lambda i, j: (0, 0)),
            ],
            out_specs=pl.BlockSpec((TB, TN), lambda i, j: (i, j)),
            compiler_params=self._compiler_params(("parallel", "parallel"),
                                                  need(TN)),
        )(xr, xi, self.w_re, self.w_im)

        if BCp == BC and NP == N:   # avoid a full-output copy when unpadded
            return out
        return out[:BC, :N]

    # --------------------------------------------------------- two-stage path
    def _forward_two_stage(self, xr, xi):
        BC = xr.shape[0]
        L, M, Lp, Mp = self.L, self.M, self.Lp, self.Mp
        nlat, NP, TN = self.nlat, self.NP_lon, self.tn_lon

        xr = jnp.pad(xr.astype(self.compute_dtype),
                     ((0, 0), (0, Lp - L), (0, Mp - M)))
        xi = jnp.pad(xi.astype(self.compute_dtype),
                     ((0, 0), (0, Lp - L), (0, Mp - M)))

        need = self._two_stage_vmem_need(TN)
        # TODO(synk): on v7x, single-buffer the constant wr/wi/wc2 inputs
        # (pl.Buffered(1)) and add a second parallel grid axis splitting the
        # lon tiles across the 2 TensorCores for tiny B*C.
        out = pl.pallas_call(
            _two_stage_irfft2_kernel,
            out_shape=jax.ShapeDtypeStruct((BC, nlat, NP), jnp.float32),
            grid=(BC, NP // TN),
            in_specs=[
                pl.BlockSpec((None, Lp, Mp), lambda i, j: (i, 0, 0)),
                pl.BlockSpec((None, Lp, Mp), lambda i, j: (i, 0, 0)),
                pl.BlockSpec((nlat, Lp), lambda i, j: (0, 0)),
                pl.BlockSpec((nlat, Lp), lambda i, j: (0, 0)),
                # lon irfft matrix stays VMEM-resident (constant index_map),
                # sliced per lon tile inside the kernel with pl.ds.
                pl.BlockSpec((2 * Mp, NP), lambda i, j: (0, 0)),
            ],
            out_specs=pl.BlockSpec((None, nlat, TN), lambda i, j: (i, 0, j)),
            scratch_shapes=[pltpu.VMEM((nlat, 2 * Mp), self.compute_dtype)],
            compiler_params=self._compiler_params(("parallel", "arbitrary"),
                                                  need),
        )(xr, xi, self.wr_lat, self.wi_lat, self.wc2)

        if NP == self.nlon:
            return out
        return out[..., :self.nlon]

    # ----------------------------------------------------------------- __call__
    def __call__(self, x):
        # x: complex64, shape (B, C, Hfreq, Wfreq)
        assert x.shape[1] % self.comm_size_h == 0
        assert x.shape[1] % self.comm_size_w == 0
        B, C = x.shape[0], x.shape[1]

        # spectrum truncation (ifft/irfft "n=" trimming + explicit slices)
        xt = x[..., :self.L, :self.M]
        xr = jnp.real(xt).reshape(B * C, self.L, self.M)
        xi = jnp.imag(xt).reshape(B * C, self.L, self.M)

        if self.use_fused:
            out = self._forward_fused(xr, xi)
        else:
            out = self._forward_two_stage(xr, xi)

        # latpad / lonpad are 0 for single-device comm groups -> no F.pad.
        return out.reshape(B, C, self.nlat, self.nlon)


if __name__ == "__main__":
    B, C = 2, 4
    nlat, nlon = 16, 16
    lmax, mmax = 12, 7
    Hf, Wf = 14, 9   # input spectral dims (sliced to lmax, mmax in forward)

    key = jax.random.PRNGKey(0)
    kr, ki = jax.random.split(key)
    x = (jax.random.normal(kr, (B, C, Hf, Wf), dtype=jnp.float32)
         + 1j * jax.random.normal(ki, (B, C, Hf, Wf), dtype=jnp.float32)
         ).astype(jnp.complex64)

    # pure-JAX reference of the single-device forward pass
    ref = jnp.fft.irfft(
        jnp.fft.ifft(x[..., :lmax, :], n=nlat, axis=-2, norm="ortho")[..., :mmax],
        n=nlon, axis=-1, norm="ortho",
    ).astype(jnp.float32)
    scale = float(jnp.max(jnp.abs(ref)))
    tol = 2e-2 * scale + 1e-4   # bf16 MXU operands, f32 accumulation

    # Path 1: fused single-matmul kernel (auto-selected at these small sizes).
    mod = DistributedInverseRealFFT2(nlat, nlon, lmax=lmax, mmax=mmax)
    out = jax.block_until_ready(mod(x))
    assert out.shape == (B, C, nlat, nlon)
    err = float(jnp.max(jnp.abs(out - ref)))
    assert err <= tol, (err, tol)

    # Path 2: two-stage (lat ifft -> lon irfft) kernel used at large resolutions.
    mod2 = DistributedInverseRealFFT2(nlat, nlon, lmax=lmax, mmax=mmax,
                                      force_two_stage=True)
    out2 = jax.block_until_ready(mod2(x))
    assert out2.shape == (B, C, nlat, nlon)
    err2 = float(jnp.max(jnp.abs(out2 - ref)))
    assert err2 <= tol, (err2, tol)

    print("KERNEL_OK")
</pallas_src>

<mosaic_0001>
module attributes {stable_mosaic.version = 11 : i64} {
  func.func @_fused_irfft2_kernel(%arg0: i32, %arg1: i32, %arg2: memref<16x84xbf16, #tpu.memory_space<vmem>>, %arg3: memref<16x84xbf16, #tpu.memory_space<vmem>>, %arg4: memref<84x256xbf16, #tpu.memory_space<vmem>>, %arg5: memref<84x256xbf16, #tpu.memory_space<vmem>>, %arg6: memref<16x256xf32, #tpu.memory_space<vmem>>) attributes {dimension_semantics = [#tpu.dimension_semantics<parallel>, #tpu.dimension_semantics<parallel>], iteration_bounds = array<i64: 1, 1>, scalar_prefetch = 0 : i64, scratch_operands = 0 : i64, tpu.core_type = #tpu.core_type<tc>, window_params = [{transform_indices = @transform_0, window_bounds = array<i64: 16, 84>}, {transform_indices = @transform_1, window_bounds = array<i64: 16, 84>}, {pipeline_mode = #tpu.pipeline_mode<synchronous>, transform_indices = @transform_2, window_bounds = array<i64: 84, 256>}, {pipeline_mode = #tpu.pipeline_mode<synchronous>, transform_indices = @transform_3, window_bounds = array<i64: 84, 256>}, {transform_indices = @transform_4, window_bounds = array<i64: 16, 256>}]} {
    %c256_i32 = arith.constant 256 : i32
    %0 = arith.muli %arg1, %c256_i32 : i32
    %1 = tpu.assume_multiple %0, 128 : i32
    %c0 = arith.constant 0 : index
    %c0_0 = arith.constant 0 : index
    %2 = vector.load %arg2[%c0, %c0_0] : memref<16x84xbf16, #tpu.memory_space<vmem>>, vector<16x84xbf16>
    %c0_1 = arith.constant 0 : index
    %3 = arith.index_cast %1 : i32 to index
    %4 = vector.load %arg4[%c0_1, %3] : memref<84x256xbf16, #tpu.memory_space<vmem>>, vector<84x256xbf16>
    %cst = arith.constant dense<0.000000e+00> : vector<16x256xf32>
    %5 = tpu.matmul %2, %4, %cst {dimension_numbers = #tpu.dot_dimension_numbers<[1], [0], [0], [1], [0, 0, 1, 1], [], []>} : vector<16x84xbf16>, vector<84x256xbf16>, vector<16x256xf32> -> vector<16x256xf32>
    %c0_2 = arith.constant 0 : index
    %c0_3 = arith.constant 0 : index
    %6 = vector.load %arg3[%c0_2, %c0_3] : memref<16x84xbf16, #tpu.memory_space<vmem>>, vector<16x84xbf16>
    %c0_4 = arith.constant 0 : index
    %7 = arith.index_cast %1 : i32 to index
    %8 = vector.load %arg5[%c0_4, %7] : memref<84x256xbf16, #tpu.memory_space<vmem>>, vector<84x256xbf16>
    %cst_5 = arith.constant dense<0.000000e+00> : vector<16x256xf32>
    %9 = tpu.matmul %6, %8, %cst_5 {dimension_numbers = #tpu.dot_dimension_numbers<[1], [0], [0], [1], [0, 0, 1, 1], [], []>} : vector<16x84xbf16>, vector<84x256xbf16>, vector<16x256xf32> -> vector<16x256xf32>
    %10 = arith.addf %5, %9 : vector<16x256xf32>
    %c0_6 = arith.constant 0 : index
    %c0_7 = arith.constant 0 : index
    %11 = vector.load %arg6[%c0_6, %c0_7] : memref<16x256xf32, #tpu.memory_space<vmem>>, vector<16x256xf32>
    tpu.vector_store %arg6[%c0_6, %c0_7], %10 {strides = array<i32>} : memref<16x256xf32, #tpu.memory_space<vmem>>, vector<16x256xf32>,
    return
  }
  func.func @transform_0(%arg0: i32, %arg1: i32) -> (i32, i32) {
    %c0_i32 = arith.constant 0 : i32
    %c0_i32_0 = arith.constant 0 : i32
    return %arg0, %c0_i32 : i32, i32
  }
  func.func @transform_1(%arg0: i32, %arg1: i32) -> (i32, i32) {
    %c0_i32 = arith.constant 0 : i32
    %c0_i32_0 = arith.constant 0 : i32
    return %arg0, %c0_i32 : i32, i32
  }
  func.func @transform_2(%arg0: i32, %arg1: i32) -> (i32, i32) {
    %c0_i32 = arith.constant 0 : i32
    %c0_i32_0 = arith.constant 0 : i32
    %c0_i32_1 = arith.constant 0 : i32
    return %c0_i32, %c0_i32_0 : i32, i32
  }
  func.func @transform_3(%arg0: i32, %arg1: i32) -> (i32, i32) {
    %c0_i32 = arith.constant 0 : i32
    %c0_i32_0 = arith.constant 0 : i32
    %c0_i32_1 = arith.constant 0 : i32
    return %c0_i32, %c0_i32_0 : i32, i32
  }
  func.func @transform_4(%arg0: i32, %arg1: i32) -> (i32, i32) {
    %c0_i32 = arith.constant 0 : i32
    return %arg0, %arg1 : i32, i32
  }
}

</mosaic_0001>

<llo_original>
// kernel: tpu_custom_call.1
$region0: #{tpu_custom_call.1}
  #allocation0 [shape = 'u32[]', space=smem, size = 0x4, offset = 0x4, fixed_abs, tag = 'smem constant byte address 0x4 - core index']
  #allocation1 [shape = 'u32[144,128]{1,0:T(1,128)}', space=vmem, size = 0x12000, scoped, tag = 'internal scratch']
  %s0 = inlined_call_operand.hbm [shape: bf16[16,84], index: 0, kind: input, shape index: {}]
  %s1 = inlined_call_operand.hbm [shape: bf16[16,84], index: 1, kind: input, shape index: {}]
  %s2 = inlined_call_operand.hbm [shape: bf16[84,256], index: 2, kind: input, shape index: {}]
  %s3 = inlined_call_operand.hbm [shape: bf16[84,256], index: 3, kind: input, shape index: {}]
  %s4 = inlined_call_operand.hbm [shape: f32[16,256], index: 4, kind: output, shape index: {}]
  %s5 = sld [smem:[#allocation0]]
  $region42: #{tpu_custom_call.1} parent=0
    _
  %s7 = ssub.s32 1, %s5
  %s8 = scalar_select 0, %s7, %s5
  $region1: #{tpu_custom_call.1} parent=0
    #allocation2 [shape = 'u8[4096]{0}', space=vmem, size = 0x1000, scoped, tag = 'input window, operand 0, single buffered']
    #allocation3 [shape = 's32[1]{0}', space=sflag, size = 0x4, scoped, tag = 'scoped memory for tpu_custom_call.1']
    #allocation4 [shape = 's32[1]{0}', space=sflag, size = 0x4, scoped, tag = 'scoped memory for tpu_custom_call.1']
    #allocation5 [shape = 'u8[4096]{0}', space=vmem, size = 0x1000, scoped, tag = 'input window, operand 1, single buffered']
    #allocation6 [shape = 's32[1]{0}', space=sflag, size = 0x4, scoped, tag = 'scoped memory for tpu_custom_call.1']
    #allocation7 [shape = 'u8[45056]{0}', space=vmem, size = 0xb000, scoped, tag = 'input window, operand 2, single buffered']
    #allocation8 [shape = 'u8[45056]{0}', space=vmem, size = 0xb000, scoped, tag = 'input window, operand 3, single buffered']
    #allocation9 [shape = 's32[1]{0}', space=sflag, size = 0x4, scoped, tag = 'scoped memory for tpu_custom_call.1']
    #allocation10 [shape = 'u8[16384]{0}', space=vmem, size = 0x4000, scoped, tag = 'output window, operand 0, single buffered']
    %9 = vsyncpa [#allocation3], 0
    %10 = vsyncpa [#allocation6], 0
    %11 = vsyncpa [#allocation9], 0
    %12 = vsyncpa [#allocation4], 0
    // Predicated region
    $region2: #{tpu_custom_call.1} parent=1 // pred_check
      _
    $region3: #{tpu_custom_call.1} parent=1 // pred_check_branch
      %14 = sbr.rel (0) target = $region5
    $region4: #{tpu_custom_call.1} parent=1 // pred_region
      %s16 = ssub.s32 128, 128
      %17 = vsyncadd [#allocation3], %s16
      %s18 = sshll.u32 [#allocation2], 4
      %s19 = int_to_ptr.vmem [resolvable:$true] %s18
      %24 = dma.hbm_to_vmem [thread:$0]  %s0, 128, %s19, [#allocation3], 64, 64, 4
    $region5: #{tpu_custom_call.1} parent=1 // pred_fallthru
      _
    // Predicated region
    $region6: #{tpu_custom_call.1} parent=1 // pred_check
      _
    $region7: #{tpu_custom_call.1} parent=1 // pred_check_branch
      %26 = sbr.rel (0) target = $region9
    $region8: #{tpu_custom_call.1} parent=1 // pred_region
      %s28 = ssub.s32 128, 128
      %29 = vsyncadd [#allocation6], %s28
      %s30 = sshll.u32 [#allocation5], 4
      %s31 = int_to_ptr.vmem [resolvable:$true] %s30
      %36 = dma.hbm_to_vmem [thread:$0]  %s1, 128, %s31, [#allocation6], 64, 64, 4
    $region9: #{tpu_custom_call.1} parent=1 // pred_fallthru
      _
    // Predicated region
    $region10: #{tpu_custom_call.1} parent=1 // pred_check
      _
    $region11: #{tpu_custom_call.1} parent=1 // pred_check_branch
      %38 = sbr.rel (0) target = $region13
    $region12: #{tpu_custom_call.1} parent=1 // pred_region
      %s40 = ssub.s32 1408, 1408
      %41 = vsyncadd [#allocation6], %s40
      %s42 = sshll.u32 [#allocation7], 4
      %s43 = int_to_ptr.vmem [resolvable:$true] %s42
      %48 = dma.hbm_to_vmem [thread:$0]  %s2, 1408, %s43, [#allocation6], 128, 128, 8
    $region13: #{tpu_custom_call.1} parent=1 // pred_fallthru
      _
    // Predicated region
    $region14: #{tpu_custom_call.1} parent=1 // pred_check
      _
    $region15: #{tpu_custom_call.1} parent=1 // pred_check_branch
      %50 = sbr.rel (0) target = $region17
    $region16: #{tpu_custom_call.1} parent=1 // pred_region
      %s52 = ssub.s32 1408, 1408
      %53 = vsyncadd [#allocation9], %s52
      %s54 = sshll.u32 [#allocation8], 4
      %s55 = int_to_ptr.vmem [resolvable:$true] %s54
      %60 = dma.hbm_to_vmem [thread:$0]  %s3, 1408, %s55, [#allocation9], 128, 128, 8
    $region17: #{tpu_custom_call.1} parent=1 // pred_fallthru
      _
    // Predicated region
    $region18: #{tpu_custom_call.1} parent=1 // pred_check
      _
    $region19: #{tpu_custom_call.1} parent=1 // pred_check_branch
      %62 = sbr.rel (0) target = $region21
    $region20: #{tpu_custom_call.1} parent=1 // pred_region
      %63 = dma.done [#allocation3], 128
    $region21: #{tpu_custom_call.1} parent=1 // pred_fallthru
      _
    // Predicated region
    $region22: #{tpu_custom_call.1} parent=1 // pred_check
      _
    $region23: #{tpu_custom_call.1} parent=1 // pred_check_branch
      %65 = sbr.rel (0) target = $region25
    $region24: #{tpu_custom_call.1} parent=1 // pred_region
      %66 = dma.done [#allocation6], 128
    $region25: #{tpu_custom_call.1} parent=1 // pred_fallthru
      _
    // Predicated region
    $region26: #{tpu_custom_call.1} parent=1 // pred_check
      _
    $region27: #{tpu_custom_call.1} parent=1 // pred_check_branch
      %68 = sbr.rel (0) target = $region29
    $region28: #{tpu_custom_call.1} parent=1 // pred_region
      %69 = dma.done [#allocation6], 1408
    $region29: #{tpu_custom_call.1} parent=1 // pred_fallthru
      _
    // Predicated region
    $region30: #{tpu_custom_call.1} parent=1 // pred_check
      _
    $region31: #{tpu_custom_call.1} parent=1 // pred_check_branch
      %71 = sbr.rel (0) target = $region33
    $region32: #{tpu_custom_call.1} parent=1 // pred_region
      %72 = dma.done [#allocation9], 1408
    $region33: #{tpu_custom_call.1} parent=1 // pred_fallthru
      _
    %s74 = smul.u32 0, 256
    %v75 = vld [vmem:[#allocation2] sm:$0xf]
    %v76 = vld [vmem:[#allocation2 + $0x4] sm:$0xf]
    %s77 = sshra.s32 %s74, 7
    %s78 = sand.u32 %s74, 127
    %s79 = smul.addr %s77, 4
    %s80 = scalar_lea.vmem [#allocation7], %s79
    %v81 = vld [vmem:[%s80] sm:$0xff]
    %v82 = vld [vmem:[%s80 + $0x8] sm:$0xff]
    %v83 = vld [vmem:[%s80 + $0x10] sm:$0xff]
    %v84 = vld [vmem:[%s80 + $0x18] sm:$0xff]
    %v85 = vld [vmem:[%s80 + $0x20] sm:$0xff]
    %v86 = vld [vmem:[%s80 + $0x28] sm:$0xff]
    %v87 = vld [vmem:[%s80 + $0x30] sm:$0xff]
    %v88 = vld [vmem:[%s80 + $0x38] sm:$0xff]
    %v89 = vld [vmem:[%s80 + $0x40] sm:$0xff]
    %v90 = vld [vmem:[%s80 + $0x48] sm:$0xff]
    %v91 = vld [vmem:[%s80 + $0x50] sm:$0x33]
    %v92 = vld [vmem:[#allocation5] sm:$0xf]
    %v93 = vld [vmem:[#allocation5 + $0x4] sm:$0xf]
    %s94 = smul.addr %s77, 4
    %s95 = scalar_lea.vmem [#allocation8], %s94
    %v96 = vld [vmem:[%s95] sm:$0xff]
    %v97 = vld [vmem:[%s95 + $0x8] sm:$0xff]
    %v98 = vld [vmem:[%s95 + $0x10] sm:$0xff]
    %v99 = vld [vmem:[%s95 + $0x18] sm:$0xff]
    %v100 = vld [vmem:[%s95 + $0x20] sm:$0xff]
    %v101 = vld [vmem:[%s95 + $0x28] sm:$0xff]
    %v102 = vld [vmem:[%s95 + $0x30] sm:$0xff]
    %v103 = vld [vmem:[%s95 + $0x38] sm:$0xff]
    %v104 = vld [vmem:[%s95 + $0x40] sm:$0xff]
    %v105 = vld [vmem:[%s95 + $0x48] sm:$0xff]
    %v106 = vld [vmem:[%s95 + $0x50] sm:$0x33]
    %v109 = vunpack.c.l.b16 %v92
    %v110 = vunpack.c.l.b16 %v93
    %v111 = vpack.c.b16 %v110, %v109
    %v123 = vunpack.c.l.b16 %v96
    %v124 = vunpack.c.h.b16 %v96
    %v125 = vunpack.c.l.b16 %v97
    %v126 = vunpack.c.h.b16 %v97
    %v127 = vunpack.c.l.b16 %v98
    %v128 = vunpack.c.h.b16 %v98
    %v129 = vunpack.c.l.b16 %v99
    %v130 = vunpack.c.h.b16 %v99
    %v131 = vunpack.c.l.b16 %v100
    %v132 = vunpack.c.h.b16 %v100
    %v133 = vunpack.c.l.b16 %v101
    %v134 = vunpack.c.h.b16 %v101
    %v135 = vunpack.c.l.b16 %v102
    %v136 = vunpack.c.h.b16 %v102
    %v137 = vunpack.c.l.b16 %v103
    %v138 = vunpack.c.h.b16 %v103
    %v139 = vunpack.c.l.b16 %v104
    %v140 = vunpack.c.h.b16 %v104
    %v141 = vunpack.c.l.b16 %v105
    %v142 = vunpack.c.h.b16 %v105
    %v143 = vunpack.c.l.b16 %v106
    %v144 = vunpack.c.h.b16 %v106
    %v145 = vpack.c.b16 %v125, %v123
    %v146 = vpack.c.b16 %v126, %v124
    %v147 = vpack.c.b16 %v129, %v127
    %v148 = vpack.c.b16 %v130, %v128
    %v149 = vpack.c.b16 %v133, %v131
    %v150 = vpack.c.b16 %v134, %v132
    %v151 = vpack.c.b16 %v137, %v135
    %v152 = vpack.c.b16 %v138, %v136
    %v153 = vpack.c.b16 %v141, %v139
    %v154 = vpack.c.b16 %v142, %v140
    %v155 = vpack.c.b16 %v143, %v143
    %v156 = vpack.c.b16 %v144, %v144
    %vm167 = vcmask 687104
    %v169 = vsel %vm167, %v111, 0
    %vm171 = vcmask 1041408
    %v173 = vsel %vm171, %v155, 0
    %v176 = vsel %vm171, %v156, 0
    %178 = vmatprep.subr.bf16.mxu0 %v146
    %179 = vmatpush1.bf16.msra.mxu0 %v145
    %180 = vmatprep.subr.bf16.mxu0 %v148
    %181 = vmatpush1.bf16.msra.mxu0 %v147
    %182 = vmatprep.subr.bf16.mxu0 %v150
    %183 = vmatpush1.bf16.msra.mxu0 %v149
    %184 = vmatprep.subr.bf16.mxu0 %v152
    %185 = vmatpush1.bf16.msra.mxu0 %v151
    %186 = vmatprep.subr.bf16.mxu0 %v154
    %187 = vmatpush1.bf16.msra.mxu0 %v153
    %188 = vmatprep.subr.bf16.mxu0 %v176
    %189 = vmatpush1.bf16.msra.mxu0 %v173
    %190 = vmatprep.subr.bf16.mxu0 0
    %191 = vmatpush1.bf16.msra.mxu0 0
    %192 = vmatprep.subr.bf16.mxu0 0
    %193 = vmatpush1.bf16.msra.mxu0 0
    %194 = vmatprep.subr.bf16.mxu0 0
    %195 = vmatpush1.bf16.msra.mxu0 0
    %196 = vmatprep.subr.bf16.mxu0 0
    %197 = vmatpush1.bf16.msra.mxu0 0
    %198 = vmatprep.subr.bf16.mxu0 0
    %199 = vmatpush1.bf16.msra.mxu0 0
    %200 = vmatprep.subr.bf16.mxu0 0
    %201 = vmatpush1.bf16.msra.mxu0 0
    %202 = vmatprep.subr.bf16.mxu0 0
    %203 = vmatpush1.bf16.msra.mxu0 0
    %204 = vmatprep.subr.bf16.mxu0 0
    %205 = vmatpush1.bf16.msra.mxu0 0
    %206 = vmatprep.subr.bf16.mxu0 0
    %207 = vmatpush1.bf16.msra.mxu0 0
    %208 = vmatprep.subr.bf16.mxu0 0
    %209 = vmatpush1.bf16.msra.mxu0 0
    %210 = vmatprep.mubr.bf16.mxu0 0
    %211 = vmatmul.mubr.bf16.gmra.mrb[0].mxu0 %v169
    %v212 = vpop.f32.mrb[0].mxu0
    %v213 = vadd.f32 0.0, %v212
    %v214 = vpop.f32.mrb[0].mxu0
    %v215 = vadd.f32 0.0, %v214
    %v216 = vpop.f32.mrb[0].mxu0
    %v217 = vadd.f32 0.0, %v216
    %v218 = vpop.f32.mrb[0].mxu0
    %v219 = vadd.f32 0.0, %v218
    %220 = vdwg.mxu0
    %v223 = vunpack.c.l.b16 %v75
    %v224 = vunpack.c.l.b16 %v76
    %v225 = vpack.c.b16 %v224, %v223
    %v237 = vunpack.c.l.b16 %v81
    %v238 = vunpack.c.h.b16 %v81
    %v239 = vunpack.c.l.b16 %v82
    %v240 = vunpack.c.h.b16 %v82
    %v241 = vunpack.c.l.b16 %v83
    %v242 = vunpack.c.h.b16 %v83
    %v243 = vunpack.c.l.b16 %v84
    %v244 = vunpack.c.h.b16 %v84
    %v245 = vunpack.c.l.b16 %v85
    %v246 = vunpack.c.h.b16 %v85
    %v247 = vunpack.c.l.b16 %v86
    %v248 = vunpack.c.h.b16 %v86
    %v249 = vunpack.c.l.b16 %v87
    %v250 = vunpack.c.h.b16 %v87
    %v251 = vunpack.c.l.b16 %v88
    %v252 = vunpack.c.h.b16 %v88
    %v253 = vunpack.c.l.b16 %v89
    %v254 = vunpack.c.h.b16 %v89
    %v255 = vunpack.c.l.b16 %v90
    %v256 = vunpack.c.h.b16 %v90
    %v257 = vunpack.c.l.b16 %v91
    %v258 = vunpack.c.h.b16 %v91
    %v259 = vpack.c.b16 %v239, %v237
    %v260 = vpack.c.b16 %v240, %v238
    %v261 = vpack.c.b16 %v243, %v241
    %v262 = vpack.c.b16 %v244, %v242
    %v263 = vpack.c.b16 %v247, %v245
    %v264 = vpack.c.b16 %v248, %v246
    %v265 = vpack.c.b16 %v251, %v249
    %v266 = vpack.c.b16 %v252, %v250
    %v267 = vpack.c.b16 %v255, %v253
    %v268 = vpack.c.b16 %v256, %v254
    %v269 = vpack.c.b16 %v257, %v257
    %v270 = vpack.c.b16 %v258, %v258
    %v282 = vsel %vm167, %v225, 0
    %v285 = vsel %vm171, %v269, 0
    %v288 = vsel %vm171, %v270, 0
    %290 = vmatprep.subr.bf16.mxu0 %v260
    %291 = vmatpush1.bf16.msra.mxu0 %v259
    %292 = vmatprep.subr.bf16.mxu0 %v262
    %293 = vmatpush1.bf16.msra.mxu0 %v261
    %294 = vmatprep.subr.bf16.mxu0 %v264
    %295 = vmatpush1.bf16.msra.mxu0 %v263
    %296 = vmatprep.subr.bf16.mxu0 %v266
    %297 = vmatpush1.bf16.msra.mxu0 %v265
    %298 = vmatprep.subr.bf16.mxu0 %v268
    %299 = vmatpush1.bf16.msra.mxu0 %v267
    %300 = vmatprep.subr.bf16.mxu0 %v288
    %301 = vmatpush1.bf16.msra.mxu0 %v285
    %302 = vmatprep.subr.bf16.mxu0 0
    %303 = vmatpush1.bf16.msra.mxu0 0
    %304 = vmatprep.subr.bf16.mxu0 0
    %305 = vmatpush1.bf16.msra.mxu0 0
    %306 = vmatprep.subr.bf16.mxu0 0
    %307 = vmatpush1.bf16.msra.mxu0 0
    %308 = vmatprep.subr.bf16.mxu0 0
    %309 = vmatpush1.bf16.msra.mxu0 0
    %310 = vmatprep.subr.bf16.mxu0 0
    %311 = vmatpush1.bf16.msra.mxu0 0
    %312 = vmatprep.subr.bf16.mxu0 0
    %313 = vmatpush1.bf16.msra.mxu0 0
    %314 = vmatprep.subr.bf16.mxu0 0
    %315 = vmatpush1.bf16.msra.mxu0 0
    %316 = vmatprep.subr.bf16.mxu0 0
    %317 = vmatpush1.bf16.msra.mxu0 0
    %318 = vmatprep.subr.bf16.mxu0 0
    %319 = vmatpush1.bf16.msra.mxu0 0
    %320 = vmatprep.subr.bf16.mxu0 0
    %321 = vmatpush1.bf16.msra.mxu0 0
    %322 = vmatprep.mubr.bf16.mxu0 0
    %323 = vmatmul.mubr.bf16.gmra.mrb[0].mxu0 %v282
    %v324 = vpop.f32.mrb[0].mxu0
    %v325 = vadd.f32 %v213, %v324
    %v326 = vpop.f32.mrb[0].mxu0
    %v327 = vadd.f32 %v215, %v326
    %v328 = vpop.f32.mrb[0].mxu0
    %v329 = vadd.f32 %v217, %v328
    %v330 = vpop.f32.mrb[0].mxu0
    %v331 = vadd.f32 %v219, %v330
    %332 = vdwg.mxu0
    %333 = vst [vmem:[#allocation10] sm:$0xff] %v325
    %334 = vst [vmem:[#allocation10 + $0x8] sm:$0xff] %v327
    %335 = vst [vmem:[#allocation10 + $0x10] sm:$0xff] %v329
    %336 = vst [vmem:[#allocation10 + $0x18] sm:$0xff] %v331
    // Predicated region
    $region34: #{tpu_custom_call.1} parent=1 // pred_check
      _
    $region35: #{tpu_custom_call.1} parent=1 // pred_check_branch
      %338 = sbr.rel (0) target = $region37
    $region36: #{tpu_custom_call.1} parent=1 // pred_region
      %s340 = ssub.s32 512, 512
      %341 = vsyncadd [#allocation4], %s340
      %s342 = sshll.u32 [#allocation10], 4
      %s343 = int_to_ptr.vmem [resolvable:$true] %s342
      %348 = dma.vmem_to_hbm [thread:$0]  %s343, 512, %s4, [#allocation4], 256, 256, 16
    $region37: #{tpu_custom_call.1} parent=1 // pred_fallthru
      _
    // Predicated region
    $region38: #{tpu_custom_call.1} parent=1 // pred_check
      _
    $region39: #{tpu_custom_call.1} parent=1 // pred_check_branch
      %350 = sbr.rel (0) target = $region41
    $region40: #{tpu_custom_call.1} parent=1 // pred_region
      %351 = dma.done [#allocation4], 512
    $region41: #{tpu_custom_call.1} parent=1 // pred_fallthru
      _
    %352 = vsyncpa [#allocation3], 1
    %353 = vsyncpa [#allocation6], 1
    %354 = vsyncpa [#allocation9], 1
    %355 = vsyncpa [#allocation4], 1

</llo_original>
